<compile_context>
chip_gen: v7x
topology: tpu7x:2x2x1
jax: 0.10.0
libtpu: 0.0.40
codegen_flags: <defaults>
</compile_context>

<pallas_src>
import functools

import jax
import jax.numpy as jnp
from jax import lax
from jax.experimental import pallas as pl
from jax.experimental.pallas import tpu as pltpu


# ----------------------------- in-kernel helpers -----------------------------

def _gelu_tanh(x):
    # 0.5 * x * (1 + tanh(sqrt(2/pi) * (x + 0.044715 * x^3)))
    c = jnp.sqrt(jnp.float32(2.0 / jnp.pi))
    return 0.5 * x * (1.0 + jnp.tanh(c * (x + 0.044715 * x * x * x)))


def _layernorm(x, scale, shift, eps=1e-5):
    mean = jnp.mean(x, axis=-1, keepdims=True)
    var = jnp.mean((x - mean) ** 2, axis=-1, keepdims=True)   # unbiased=False
    return (x - mean) * lax.rsqrt(var + eps) * scale + shift


# ------------------------ kernel 1: LN1 + QKV projection ---------------------

def ln_qkv_kernel(x_ref, ln1_s_ref, ln1_b_ref, wq_ref, wk_ref, wv_ref,
                  q_ref, k_ref, v_ref, *, n_heads, sm_scale):
    f32 = jnp.float32
    bf16 = jnp.bfloat16
    HD = q_ref.shape[-1]

    x = x_ref[0].astype(f32)                                        # (TS, E)
    h = _layernorm(x, ln1_s_ref[...], ln1_b_ref[...]).astype(bf16)

    def project(w_ref, out_ref, scale):
        # One lane-dense (TS,E)@(E,E) matmul; heads split with static lane
        # slices afterwards (once per token, not once per q-tile).
        p = jnp.dot(h, w_ref[...], preferred_element_type=f32)
        if scale is not None:
            p = p * scale
        p = p.astype(bf16)
        for hh in range(n_heads):
            out_ref[hh] = p[:, hh * HD:(hh + 1) * HD]

    project(wq_ref, q_ref, sm_scale)      # fold 1/sqrt(head_dim) into q once
    project(wk_ref, k_ref, None)
    project(wv_ref, v_ref, None)


# ------------- kernel 2: flash attention + out-proj + LN2 + FF ---------------

def attn_ffn_kernel(x_ref, q_ref, k_ref, v_ref,
                    wo_ref, bo_ref, ln2_s_ref, ln2_b_ref,
                    w1_ref, b1_ref, w2_ref, b2_ref,
                    o_ref,
                    m_sc, l_sc, acc_sc, ctx_sc, *, n_heads):
    f32 = jnp.float32
    bf16 = jnp.bfloat16
    _, TQ, HD = q_ref.shape
    TK = k_ref.shape[1]

    qi = pl.program_id(1)
    kj = pl.program_id(2)
    nk = pl.num_programs(2)

    q_start = qi * TQ
    q_end = q_start + TQ - 1
    k_start = kj * TK
    k_end = k_start + TK - 1

    # -------- first kv step: reset per-head flash accumulators ---------------
    @pl.when(kj == 0)
    def _init():
        m_sc[...] = jnp.full_like(m_sc, -1e30)
        l_sc[...] = jnp.zeros_like(l_sc)
        acc_sc[...] = jnp.zeros_like(acc_sc)

    def flash_update(bias):
        def head_body(h, carry):
            kh = k_ref[h]                                           # (TK, HD)
            vh = v_ref[h]                                           # (TK, HD)
            # q @ k^T without an explicit transpose: contract last dims.
            s = lax.dot_general(q_ref[h], kh,
                                dimension_numbers=(((1,), (1,)), ((), ())),
                                preferred_element_type=f32)         # (TQ, TK)
            if bias is not None:
                s = s + bias
            m_prev = m_sc[h]                                        # (TQ, 1)
            m_new = jnp.maximum(m_prev, jnp.max(s, axis=-1, keepdims=True))
            alpha = jnp.exp(m_prev - m_new)
            p = jnp.exp(s - m_new)
            l_sc[h] = alpha * l_sc[h] + jnp.sum(p, axis=-1, keepdims=True)
            acc_sc[h] = alpha * acc_sc[h] + jnp.dot(
                p.astype(bf16), vh, preferred_element_type=f32)
            m_sc[h] = m_new
            return carry
        lax.fori_loop(0, n_heads, head_body, 0)

    # -------- interior tiles (fully visible): no mask at all -----------------
    @pl.when(k_end <= q_start)
    def _interior():
        flash_update(None)

    # -------- diagonal tiles: finite causal bias ------------------------------
    @pl.when(jnp.logical_and(k_start <= q_end, k_end > q_start))
    def _diagonal():
        q_ids = q_start + lax.broadcasted_iota(jnp.int32, (TQ, TK), 0)
        k_ids = k_start + lax.broadcasted_iota(jnp.int32, (TQ, TK), 1)
        bias = jnp.where(k_ids <= q_ids, jnp.float32(0.0), jnp.float32(-1e30))
        flash_update(bias)

    # (tiles with k_start > q_end are fully masked: no compute, and the kv
    #  index_map clamp means no fresh DMA was issued for them either)

    # -------- last kv step: out-proj + residual + LN2 + FF + residual --------
    @pl.when(kj == nk - 1)
    def _finalize():
        # Repack heads into a lane-dense (TQ, E) context, then one full-depth
        # (TQ,E)@(E,E) out-projection.  Exact division for the softmax
        # denominator (runs once per q-tile, cost negligible).
        for hh in range(n_heads):
            ctx_sc[:, hh * HD:(hh + 1) * HD] = acc_sc[hh] / l_sc[hh]
        attn = jnp.dot(ctx_sc[...].astype(bf16), wo_ref[...],
                       preferred_element_type=f32) + bo_ref[...]
        x1 = x_ref[0].astype(f32) + attn        # residual (dropout = identity)

        h2 = _layernorm(x1, ln2_s_ref[...], ln2_b_ref[...]).astype(bf16)
        f = jnp.dot(h2, w1_ref[...], preferred_element_type=f32) + b1_ref[...]
        f = _gelu_tanh(f).astype(bf16)
        y = jnp.dot(f, w2_ref[...], preferred_element_type=f32) + b2_ref[...]
        o_ref[0] = (x1 + y).astype(o_ref.dtype)  # residual (dropout = identity)


# --------------------------------- wrapper -----------------------------------

def _vmem_limit(requested_bytes):
    try:
        cap = pltpu.get_tpu_info().vmem_capacity_bytes
    except Exception:
        cap = 128 * 2 ** 20
    cap = int(0.75 * cap)      # headroom for the compiler (esp. v7x: 64 MiB)
    return int(max(min(requested_bytes, cap), min(32 * 2 ** 20, cap)))


def transformer_block(x, params, n_heads, *, q_tile=256, kv_tile=256,
                      row_tile=256):
    """Forward pass of the pre-LN transformer block.  x: (B, S, E) float32."""
    B, S, E = x.shape
    assert E % n_heads == 0
    HD = E // n_heads
    Hf = 4 * E
    TQ = min(q_tile, S)
    TK = min(kv_tile, S)
    TS = min(row_tile, S)
    assert S % TQ == 0 and S % TK == 0 and S % TS == 0, \
        "sequence length must divide the tile sizes"
    NQ, NK, NS = S // TQ, S // TK, S // TS

    cdt = jnp.bfloat16
    wq = params["wq"].astype(cdt)
    wk = params["wk"].astype(cdt)
    wv = params["wv"].astype(cdt)
    wo = params["wo"].astype(cdt)
    w1 = params["w1"].astype(cdt)
    w2 = params["w2"].astype(cdt)
    sm_scale = 1.0 / (HD ** 0.5)

    # ---------------- kernel 1: LN1 + QKV projection (once per token) --------
    qkv_vmem = 2 * (3 * E * E * 2 * 2 + TS * E * 4 * 2
                    + 3 * n_heads * TS * max(HD, 128) * 2 * 2
                    + 4 * TS * E * 4)
    const_p = lambda b, si: (0, 0)
    q, k, v = pl.pallas_call(
        functools.partial(ln_qkv_kernel, n_heads=n_heads, sm_scale=sm_scale),
        out_shape=tuple(jax.ShapeDtypeStruct((B, n_heads, S, HD), cdt)
                        for _ in range(3)),
        grid=(B, NS),
        in_specs=[
            pl.BlockSpec((1, TS, E), lambda b, si: (b, si, 0)),   # x rows
            pl.BlockSpec((1, E), const_p),                        # ln1 scale
            pl.BlockSpec((1, E), const_p),                        # ln1 shift
            pl.BlockSpec((E, E), const_p),                        # W_query
            pl.BlockSpec((E, E), const_p),                        # W_key
            pl.BlockSpec((E, E), const_p),                        # W_value
        ],
        out_specs=tuple(
            pl.BlockSpec((None, n_heads, TS, HD), lambda b, si: (b, 0, si, 0))
            for _ in range(3)),
        compiler_params=pltpu.CompilerParams(
            dimension_semantics=("parallel", "parallel"),
            vmem_limit_bytes=_vmem_limit(qkv_vmem),
        ),
    )(x, params["ln1_s"], params["ln1_b"], wq, wk, wv)

    # ---------------- kernel 2: flash attention + out-proj + FF --------------
    last_kv_block = lambda qi: ((qi + 1) * TQ - 1) // TK     # causal DMA clamp
    kv_idx = lambda b, qi, kj: (b, 0, jnp.minimum(kj, last_kv_block(qi)), 0)
    const_a = lambda b, qi, kj: (0, 0)

    attn_vmem = 2 * ((E * E + 2 * E * Hf) * 2 * 2                  # wo/w1/w2
                     + 3 * n_heads * max(TQ, TK) * max(HD, 128) * 2 * 2
                     + 2 * TQ * E * 4 * 2                          # x / out tiles
                     + n_heads * TQ * (max(HD, 128) + 2 * 128) * 4  # m/l/acc
                     + TQ * E * 4                                  # ctx scratch
                     + TQ * Hf * 4 + 3 * TQ * TK * 4 + 2 * TQ * E * 4)

    cost = pl.CostEstimate(
        flops=int(B * S * (4 * S * E + 18 * E * E)),
        transcendentals=int(B * n_heads * S * S + B * S * Hf),
        bytes_accessed=int(2 * B * S * E * 4 + 3 * B * S * E * 2
                           + (E * E + 2 * E * Hf) * 2),
    )

    out = pl.pallas_call(
        functools.partial(attn_ffn_kernel, n_heads=n_heads),
        out_shape=jax.ShapeDtypeStruct((B, S, E), x.dtype),
        grid=(B, NQ, NK),
        in_specs=[
            pl.BlockSpec((1, TQ, E), lambda b, qi, kj: (b, qi, 0)),  # residual x
            pl.BlockSpec((None, n_heads, TQ, HD),
                         lambda b, qi, kj: (b, 0, qi, 0)),           # q (pre-scaled)
            pl.BlockSpec((None, n_heads, TK, HD), kv_idx),           # k
            pl.BlockSpec((None, n_heads, TK, HD), kv_idx),           # v
            pl.BlockSpec((E, E), const_a),                           # out_proj W
            pl.BlockSpec((1, E), const_a),                           # out_proj b
            pl.BlockSpec((1, E), const_a),                           # ln2 scale
            pl.BlockSpec((1, E), const_a),                           # ln2 shift
            pl.BlockSpec((E, Hf), const_a),                          # ff W1
            pl.BlockSpec((1, Hf), const_a),                          # ff b1
            pl.BlockSpec((Hf, E), const_a),                          # ff W2
            pl.BlockSpec((1, E), const_a),                           # ff b2
        ],
        out_specs=pl.BlockSpec((1, TQ, E), lambda b, qi, kj: (b, qi, 0)),
        scratch_shapes=[
            pltpu.VMEM((n_heads, TQ, 1), jnp.float32),    # running max
            pltpu.VMEM((n_heads, TQ, 1), jnp.float32),    # running denominator
            pltpu.VMEM((n_heads, TQ, HD), jnp.float32),   # per-head context acc
            pltpu.VMEM((TQ, E), jnp.float32),             # repacked context
        ],
        compiler_params=pltpu.CompilerParams(
            dimension_semantics=("parallel", "parallel", "arbitrary"),
            vmem_limit_bytes=_vmem_limit(attn_vmem),
        ),
        cost_estimate=cost,
    )(x, q, k, v,
      wo, params["bo"], params["ln2_s"], params["ln2_b"],
      w1, params["b1"], w2, params["b2"])
    return out


# --------------------------- deterministic params ----------------------------

def init_params(key, emb_dim):
    H = 4 * emb_dim
    ks = jax.random.split(key, 8)
    n = lambda k, shp: (0.02 * jax.random.normal(k, shp)).astype(jnp.float32)
    return {
        "ln1_s": jnp.ones((1, emb_dim), jnp.float32),
        "ln1_b": jnp.zeros((1, emb_dim), jnp.float32),
        "wq": n(ks[0], (emb_dim, emb_dim)),
        "wk": n(ks[1], (emb_dim, emb_dim)),
        "wv": n(ks[2], (emb_dim, emb_dim)),
        "wo": n(ks[3], (emb_dim, emb_dim)),
        "bo": n(ks[4], (1, emb_dim)),
        "ln2_s": jnp.ones((1, emb_dim), jnp.float32),
        "ln2_b": jnp.zeros((1, emb_dim), jnp.float32),
        "w1": n(ks[5], (emb_dim, H)),
        "b1": n(ks[6], (1, H)),
        "w2": n(ks[7], (H, emb_dim)),
        "b2": jnp.zeros((1, emb_dim), jnp.float32),
    }


# ------------------------------ pure-JAX reference ----------------------------

def reference_block(x, p, n_heads):
    B, S, E = x.shape
    hd = E // n_heads

    def ln(v, s, b):
        m = v.mean(-1, keepdims=True)
        var = ((v - m) ** 2).mean(-1, keepdims=True)
        return s * (v - m) / jnp.sqrt(var + 1e-5) + b

    h = ln(x, p["ln1_s"][0], p["ln1_b"][0])
    q = (h @ p["wq"]).reshape(B, S, n_heads, hd).transpose(0, 2, 1, 3)
    k = (h @ p["wk"]).reshape(B, S, n_heads, hd).transpose(0, 2, 1, 3)
    v = (h @ p["wv"]).reshape(B, S, n_heads, hd).transpose(0, 2, 1, 3)
    s = jnp.einsum("bhqd,bhkd->bhqk", q, k) / jnp.sqrt(jnp.float32(hd))
    mask = jnp.tril(jnp.ones((S, S), bool))
    s = jnp.where(mask, s, -jnp.inf)
    w = jax.nn.softmax(s, axis=-1)
    ctx = jnp.einsum("bhqk,bhkd->bhqd", w, v).transpose(0, 2, 1, 3).reshape(B, S, E)
    x = x + (ctx @ p["wo"] + p["bo"][0])

    h2 = ln(x, p["ln2_s"][0], p["ln2_b"][0])
    f = h2 @ p["w1"] + p["b1"][0]
    f = 0.5 * f * (1 + jnp.tanh(jnp.sqrt(2.0 / jnp.pi) * (f + 0.044715 * f**3)))
    f = f @ p["w2"] + p["b2"][0]
    return x + f


# ----------------------------------- main -------------------------------------

if __name__ == "__main__":
    def run_case(B, S, E, n_heads, q_tile, kv_tile, key):
        kx, kp = jax.random.split(key)
        x = jax.random.normal(kx, (B, S, E), dtype=jnp.float32)
        params = init_params(kp, E)
        out = transformer_block(x, params, n_heads,
                                q_tile=q_tile, kv_tile=kv_tile, row_tile=q_tile)
        out = jax.block_until_ready(out)
        ref = reference_block(x, params, n_heads)
        assert out.shape == (B, S, E)
        err = float(jnp.max(jnp.abs(out - ref)))
        # bf16 MXU inputs -> loosened tolerance vs the f32 reference
        assert jnp.allclose(out, ref, atol=3e-2, rtol=3e-2), \
            f"mismatch vs reference, max abs diff = {err}"

    key = jax.random.PRNGKey(0)
    k1, k2 = jax.random.split(key)
    # tiny config (single tile per batch element): emb_dim=32, n_heads=4
    run_case(B=2, S=8, E=32, n_heads=4, q_tile=8, kv_tile=8, key=k1)
    # multi-tile config exercising flash accumulation, the causal DMA clamp,
    # interior/diagonal fast paths and the fused out-proj / FF finalize
    run_case(B=2, S=256, E=128, n_heads=4, q_tile=128, kv_tile=128, key=k2)

    print("KERNEL_OK")
</pallas_src>

<mosaic_0001>
module attributes {stable_mosaic.version = 11 : i64} {
  func.func @ln_qkv_kernel(%arg0: i32, %arg1: i32, %arg2: memref<1x8x32xf32, #tpu.memory_space<vmem>>, %arg3: memref<1x32xf32, #tpu.memory_space<vmem>>, %arg4: memref<1x32xf32, #tpu.memory_space<vmem>>, %arg5: memref<32x32xbf16, #tpu.memory_space<vmem>>, %arg6: memref<32x32xbf16, #tpu.memory_space<vmem>>, %arg7: memref<32x32xbf16, #tpu.memory_space<vmem>>, %arg8: memref<1x4x8x8xbf16, #tpu.memory_space<vmem>>, %arg9: memref<1x4x8x8xbf16, #tpu.memory_space<vmem>>, %arg10: memref<1x4x8x8xbf16, #tpu.memory_space<vmem>>) attributes {dimension_semantics = [#tpu.dimension_semantics<parallel>, #tpu.dimension_semantics<parallel>], iteration_bounds = array<i64: 2, 1>, scalar_prefetch = 0 : i64, scratch_operands = 0 : i64, tpu.core_type = #tpu.core_type<tc>, window_params = [{transform_indices = @transform_0, window_bounds = array<i64: 1, 8, 32>}, {pipeline_mode = #tpu.pipeline_mode<synchronous>, transform_indices = @transform_1, window_bounds = array<i64: 1, 32>}, {pipeline_mode = #tpu.pipeline_mode<synchronous>, transform_indices = @transform_2, window_bounds = array<i64: 1, 32>}, {pipeline_mode = #tpu.pipeline_mode<synchronous>, transform_indices = @transform_3, window_bounds = array<i64: 32, 32>}, {pipeline_mode = #tpu.pipeline_mode<synchronous>, transform_indices = @transform_4, window_bounds = array<i64: 32, 32>}, {pipeline_mode = #tpu.pipeline_mode<synchronous>, transform_indices = @transform_5, window_bounds = array<i64: 32, 32>}, {transform_indices = @transform_6, window_bounds = array<i64: 1, 4, 8, 8>}, {transform_indices = @transform_7, window_bounds = array<i64: 1, 4, 8, 8>}, {transform_indices = @transform_8, window_bounds = array<i64: 1, 4, 8, 8>}]} {
    %c0 = arith.constant 0 : index
    %c0_0 = arith.constant 0 : index
    %c0_1 = arith.constant 0 : index
    %0 = vector.load %arg2[%c0, %c0_0, %c0_1] : memref<1x8x32xf32, #tpu.memory_space<vmem>>, vector<1x8x32xf32>
    %1 = vector.shape_cast %0 : vector<1x8x32xf32> to vector<8x32xf32>
    %c0_2 = arith.constant 0 : index
    %c0_3 = arith.constant 0 : index
    %2 = vector.load %arg3[%c0_2, %c0_3] : memref<1x32xf32, #tpu.memory_space<vmem>>, vector<1x32xf32>
    %c0_4 = arith.constant 0 : index
    %c0_5 = arith.constant 0 : index
    %3 = vector.load %arg4[%c0_4, %c0_5] : memref<1x32xf32, #tpu.memory_space<vmem>>, vector<1x32xf32>
    %cst = arith.constant dense<0.000000e+00> : vector<8xf32>
    %4 = vector.multi_reduction <add>, %1, %cst [1] : vector<8x32xf32> to vector<8xf32>
    %5 = vector.shape_cast %4 : vector<8xf32> to vector<8x1xf32>
    %cst_6 = arith.constant 3.200000e+01 : f32
    %6 = vector.broadcast %cst_6 : f32 to vector<8x1xf32>
    %7 = arith.divf %5, %6 : vector<8x1xf32>
    %8 = vector.broadcast %7 : vector<8x1xf32> to vector<8x32xf32>
    %9 = arith.subf %1, %8 : vector<8x32xf32>
    %10 = arith.mulf %9, %9 : vector<8x32xf32>
    %cst_7 = arith.constant dense<0.000000e+00> : vector<8xf32>
    %11 = vector.multi_reduction <add>, %10, %cst_7 [1] : vector<8x32xf32> to vector<8xf32>
    %12 = vector.shape_cast %11 : vector<8xf32> to vector<8x1xf32>
    %cst_8 = arith.constant 3.200000e+01 : f32
    %13 = vector.broadcast %cst_8 : f32 to vector<8x1xf32>
    %14 = arith.divf %12, %13 : vector<8x1xf32>
    %15 = vector.broadcast %7 : vector<8x1xf32> to vector<8x32xf32>
    %16 = arith.subf %1, %15 : vector<8x32xf32>
    %cst_9 = arith.constant 9.99999974E-6 : f32
    %17 = vector.broadcast %cst_9 : f32 to vector<8x1xf32>
    %18 = arith.addf %14, %17 : vector<8x1xf32>
    %19 = math.rsqrt %18 : vector<8x1xf32>
    %20 = vector.broadcast %19 : vector<8x1xf32> to vector<8x32xf32>
    %21 = arith.mulf %16, %20 : vector<8x32xf32>
    %22 = vector.broadcast %2 : vector<1x32xf32> to vector<8x32xf32>
    %23 = arith.mulf %21, %22 : vector<8x32xf32>
    %24 = vector.broadcast %3 : vector<1x32xf32> to vector<8x32xf32>
    %25 = arith.addf %23, %24 : vector<8x32xf32>
    %26 = arith.truncf %25 : vector<8x32xf32> to vector<8x32xbf16>
    %c0_10 = arith.constant 0 : index
    %c0_11 = arith.constant 0 : index
    %27 = vector.load %arg5[%c0_10, %c0_11] : memref<32x32xbf16, #tpu.memory_space<vmem>>, vector<32x32xbf16>
    %cst_12 = arith.constant dense<0.000000e+00> : vector<8x32xf32>
    %28 = tpu.matmul %26, %27, %cst_12 {dimension_numbers = #tpu.dot_dimension_numbers<[1], [0], [0], [1], [0, 0, 1, 1], [], []>} : vector<8x32xbf16>, vector<32x32xbf16>, vector<8x32xf32> -> vector<8x32xf32>
    %cst_13 = arith.constant 0.353553385 : f32
    %29 = vector.broadcast %cst_13 : f32 to vector<8x32xf32>
    %30 = arith.mulf %28, %29 : vector<8x32xf32>
    %31 = arith.truncf %30 : vector<8x32xf32> to vector<8x32xbf16>
    %32 = vector.extract_strided_slice %31 {offsets = [0, 0], sizes = [8, 8], strides = [1, 1]} : vector<8x32xbf16> to vector<8x8xbf16>
    %c0_14 = arith.constant 0 : index
    %c0_15 = arith.constant 0 : index
    %c0_16 = arith.constant 0 : index
    %c0_17 = arith.constant 0 : index
    %33 = vector.load %arg8[%c0_14, %c0_15, %c0_16, %c0_17] : memref<1x4x8x8xbf16, #tpu.memory_space<vmem>>, vector<1x1x8x8xbf16>
    %34 = vector.shape_cast %33 : vector<1x1x8x8xbf16> to vector<8x8xbf16>
    %35 = vector.shape_cast %32 : vector<8x8xbf16> to vector<1x1x8x8xbf16>
    tpu.vector_store %arg8[%c0_14, %c0_15, %c0_16, %c0_17], %35 {strides = array<i32>} : memref<1x4x8x8xbf16, #tpu.memory_space<vmem>>, vector<1x1x8x8xbf16>,
    %36 = vector.extract_strided_slice %31 {offsets = [0, 8], sizes = [8, 8], strides = [1, 1]} : vector<8x32xbf16> to vector<8x8xbf16>
    %c0_18 = arith.constant 0 : index
    %c1 = arith.constant 1 : index
    %c0_19 = arith.constant 0 : index
    %c0_20 = arith.constant 0 : index
    %37 = vector.load %arg8[%c0_18, %c1, %c0_19, %c0_20] : memref<1x4x8x8xbf16, #tpu.memory_space<vmem>>, vector<1x1x8x8xbf16>
    %38 = vector.shape_cast %37 : vector<1x1x8x8xbf16> to vector<8x8xbf16>
    %39 = vector.shape_cast %36 : vector<8x8xbf16> to vector<1x1x8x8xbf16>
    tpu.vector_store %arg8[%c0_18, %c1, %c0_19, %c0_20], %39 {strides = array<i32>} : memref<1x4x8x8xbf16, #tpu.memory_space<vmem>>, vector<1x1x8x8xbf16>,
    %40 = vector.extract_strided_slice %31 {offsets = [0, 16], sizes = [8, 8], strides = [1, 1]} : vector<8x32xbf16> to vector<8x8xbf16>
    %c0_21 = arith.constant 0 : index
    %c2 = arith.constant 2 : index
    %c0_22 = arith.constant 0 : index
    %c0_23 = arith.constant 0 : index
    %41 = vector.load %arg8[%c0_21, %c2, %c0_22, %c0_23] : memref<1x4x8x8xbf16, #tpu.memory_space<vmem>>, vector<1x1x8x8xbf16>
    %42 = vector.shape_cast %41 : vector<1x1x8x8xbf16> to vector<8x8xbf16>
    %43 = vector.shape_cast %40 : vector<8x8xbf16> to vector<1x1x8x8xbf16>
    tpu.vector_store %arg8[%c0_21, %c2, %c0_22, %c0_23], %43 {strides = array<i32>} : memref<1x4x8x8xbf16, #tpu.memory_space<vmem>>, vector<1x1x8x8xbf16>,
    %44 = vector.extract_strided_slice %31 {offsets = [0, 24], sizes = [8, 8], strides = [1, 1]} : vector<8x32xbf16> to vector<8x8xbf16>
    %c0_24 = arith.constant 0 : index
    %c3 = arith.constant 3 : index
    %c0_25 = arith.constant 0 : index
    %c0_26 = arith.constant 0 : index
    %45 = vector.load %arg8[%c0_24, %c3, %c0_25, %c0_26] : memref<1x4x8x8xbf16, #tpu.memory_space<vmem>>, vector<1x1x8x8xbf16>
    %46 = vector.shape_cast %45 : vector<1x1x8x8xbf16> to vector<8x8xbf16>
    %47 = vector.shape_cast %44 : vector<8x8xbf16> to vector<1x1x8x8xbf16>
    tpu.vector_store %arg8[%c0_24, %c3, %c0_25, %c0_26], %47 {strides = array<i32>} : memref<1x4x8x8xbf16, #tpu.memory_space<vmem>>, vector<1x1x8x8xbf16>,
    %c0_27 = arith.constant 0 : index
    %c0_28 = arith.constant 0 : index
    %48 = vector.load %arg6[%c0_27, %c0_28] : memref<32x32xbf16, #tpu.memory_space<vmem>>, vector<32x32xbf16>
    %cst_29 = arith.constant dense<0.000000e+00> : vector<8x32xf32>
    %49 = tpu.matmul %26, %48, %cst_29 {dimension_numbers = #tpu.dot_dimension_numbers<[1], [0], [0], [1], [0, 0, 1, 1], [], []>} : vector<8x32xbf16>, vector<32x32xbf16>, vector<8x32xf32> -> vector<8x32xf32>
    %50 = arith.truncf %49 : vector<8x32xf32> to vector<8x32xbf16>
    %51 = vector.extract_strided_slice %50 {offsets = [0, 0], sizes = [8, 8], strides = [1, 1]} : vector<8x32xbf16> to vector<8x8xbf16>
    %c0_30 = arith.constant 0 : index
    %c0_31 = arith.constant 0 : index
    %c0_32 = arith.constant 0 : index
    %c0_33 = arith.constant 0 : index
    %52 = vector.load %arg9[%c0_30, %c0_31, %c0_32, %c0_33] : memref<1x4x8x8xbf16, #tpu.memory_space<vmem>>, vector<1x1x8x8xbf16>
    %53 = vector.shape_cast %52 : vector<1x1x8x8xbf16> to vector<8x8xbf16>
    %54 = vector.shape_cast %51 : vector<8x8xbf16> to vector<1x1x8x8xbf16>
    tpu.vector_store %arg9[%c0_30, %c0_31, %c0_32, %c0_33], %54 {strides = array<i32>} : memref<1x4x8x8xbf16, #tpu.memory_space<vmem>>, vector<1x1x8x8xbf16>,
    %55 = vector.extract_strided_slice %50 {offsets = [0, 8], sizes = [8, 8], strides = [1, 1]} : vector<8x32xbf16> to vector<8x8xbf16>
    %c0_34 = arith.constant 0 : index
    %c1_35 = arith.constant 1 : index
    %c0_36 = arith.constant 0 : index
    %c0_37 = arith.constant 0 : index
    %56 = vector.load %arg9[%c0_34, %c1_35, %c0_36, %c0_37] : memref<1x4x8x8xbf16, #tpu.memory_space<vmem>>, vector<1x1x8x8xbf16>
    %57 = vector.shape_cast %56 : vector<1x1x8x8xbf16> to vector<8x8xbf16>
    %58 = vector.shape_cast %55 : vector<8x8xbf16> to vector<1x1x8x8xbf16>
    tpu.vector_store %arg9[%c0_34, %c1_35, %c0_36, %c0_37], %58 {strides = array<i32>} : memref<1x4x8x8xbf16, #tpu.memory_space<vmem>>, vector<1x1x8x8xbf16>,
    %59 = vector.extract_strided_slice %50 {offsets = [0, 16], sizes = [8, 8], strides = [1, 1]} : vector<8x32xbf16> to vector<8x8xbf16>
    %c0_38 = arith.constant 0 : index
    %c2_39 = arith.constant 2 : index
    %c0_40 = arith.constant 0 : index
    %c0_41 = arith.constant 0 : index
    %60 = vector.load %arg9[%c0_38, %c2_39, %c0_40, %c0_41] : memref<1x4x8x8xbf16, #tpu.memory_space<vmem>>, vector<1x1x8x8xbf16>
    %61 = vector.shape_cast %60 : vector<1x1x8x8xbf16> to vector<8x8xbf16>
    %62 = vector.shape_cast %59 : vector<8x8xbf16> to vector<1x1x8x8xbf16>
    tpu.vector_store %arg9[%c0_38, %c2_39, %c0_40, %c0_41], %62 {strides = array<i32>} : memref<1x4x8x8xbf16, #tpu.memory_space<vmem>>, vector<1x1x8x8xbf16>,
    %63 = vector.extract_strided_slice %50 {offsets = [0, 24], sizes = [8, 8], strides = [1, 1]} : vector<8x32xbf16> to vector<8x8xbf16>
    %c0_42 = arith.constant 0 : index
    %c3_43 = arith.constant 3 : index
    %c0_44 = arith.constant 0 : index
    %c0_45 = arith.constant 0 : index
    %64 = vector.load %arg9[%c0_42, %c3_43, %c0_44, %c0_45] : memref<1x4x8x8xbf16, #tpu.memory_space<vmem>>, vector<1x1x8x8xbf16>
    %65 = vector.shape_cast %64 : vector<1x1x8x8xbf16> to vector<8x8xbf16>
    %66 = vector.shape_cast %63 : vector<8x8xbf16> to vector<1x1x8x8xbf16>
    tpu.vector_store %arg9[%c0_42, %c3_43, %c0_44, %c0_45], %66 {strides = array<i32>} : memref<1x4x8x8xbf16, #tpu.memory_space<vmem>>, vector<1x1x8x8xbf16>,
    %c0_46 = arith.constant 0 : index
    %c0_47 = arith.constant 0 : index
    %67 = vector.load %arg7[%c0_46, %c0_47] : memref<32x32xbf16, #tpu.memory_space<vmem>>, vector<32x32xbf16>
    %cst_48 = arith.constant dense<0.000000e+00> : vector<8x32xf32>
    %68 = tpu.matmul %26, %67, %cst_48 {dimension_numbers = #tpu.dot_dimension_numbers<[1], [0], [0], [1], [0, 0, 1, 1], [], []>} : vector<8x32xbf16>, vector<32x32xbf16>, vector<8x32xf32> -> vector<8x32xf32>
    %69 = arith.truncf %68 : vector<8x32xf32> to vector<8x32xbf16>
    %70 = vector.extract_strided_slice %69 {offsets = [0, 0], sizes = [8, 8], strides = [1, 1]} : vector<8x32xbf16> to vector<8x8xbf16>
    %c0_49 = arith.constant 0 : index
    %c0_50 = arith.constant 0 : index
    %c0_51 = arith.constant 0 : index
    %c0_52 = arith.constant 0 : index
    %71 = vector.load %arg10[%c0_49, %c0_50, %c0_51, %c0_52] : memref<1x4x8x8xbf16, #tpu.memory_space<vmem>>, vector<1x1x8x8xbf16>
    %72 = vector.shape_cast %71 : vector<1x1x8x8xbf16> to vector<8x8xbf16>
    %73 = vector.shape_cast %70 : vector<8x8xbf16> to vector<1x1x8x8xbf16>
    tpu.vector_store %arg10[%c0_49, %c0_50, %c0_51, %c0_52], %73 {strides = array<i32>} : memref<1x4x8x8xbf16, #tpu.memory_space<vmem>>, vector<1x1x8x8xbf16>,
    %74 = vector.extract_strided_slice %69 {offsets = [0, 8], sizes = [8, 8], strides = [1, 1]} : vector<8x32xbf16> to vector<8x8xbf16>
    %c0_53 = arith.constant 0 : index
    %c1_54 = arith.constant 1 : index
    %c0_55 = arith.constant 0 : index
    %c0_56 = arith.constant 0 : index
    %75 = vector.load %arg10[%c0_53, %c1_54, %c0_55, %c0_56] : memref<1x4x8x8xbf16, #tpu.memory_space<vmem>>, vector<1x1x8x8xbf16>
    %76 = vector.shape_cast %75 : vector<1x1x8x8xbf16> to vector<8x8xbf16>
    %77 = vector.shape_cast %74 : vector<8x8xbf16> to vector<1x1x8x8xbf16>
    tpu.vector_store %arg10[%c0_53, %c1_54, %c0_55, %c0_56], %77 {strides = array<i32>} : memref<1x4x8x8xbf16, #tpu.memory_space<vmem>>, vector<1x1x8x8xbf16>,
    %78 = vector.extract_strided_slice %69 {offsets = [0, 16], sizes = [8, 8], strides = [1, 1]} : vector<8x32xbf16> to vector<8x8xbf16>
    %c0_57 = arith.constant 0 : index
    %c2_58 = arith.constant 2 : index
    %c0_59 = arith.constant 0 : index
    %c0_60 = arith.constant 0 : index
    %79 = vector.load %arg10[%c0_57, %c2_58, %c0_59, %c0_60] : memref<1x4x8x8xbf16, #tpu.memory_space<vmem>>, vector<1x1x8x8xbf16>
    %80 = vector.shape_cast %79 : vector<1x1x8x8xbf16> to vector<8x8xbf16>
    %81 = vector.shape_cast %78 : vector<8x8xbf16> to vector<1x1x8x8xbf16>
    tpu.vector_store %arg10[%c0_57, %c2_58, %c0_59, %c0_60], %81 {strides = array<i32>} : memref<1x4x8x8xbf16, #tpu.memory_space<vmem>>, vector<1x1x8x8xbf16>,
    %82 = vector.extract_strided_slice %69 {offsets = [0, 24], sizes = [8, 8], strides = [1, 1]} : vector<8x32xbf16> to vector<8x8xbf16>
    %c0_61 = arith.constant 0 : index
    %c3_62 = arith.constant 3 : index
    %c0_63 = arith.constant 0 : index
    %c0_64 = arith.constant 0 : index
    %83 = vector.load %arg10[%c0_61, %c3_62, %c0_63, %c0_64] : memref<1x4x8x8xbf16, #tpu.memory_space<vmem>>, vector<1x1x8x8xbf16>
    %84 = vector.shape_cast %83 : vector<1x1x8x8xbf16> to vector<8x8xbf16>
    %85 = vector.shape_cast %82 : vector<8x8xbf16> to vector<1x1x8x8xbf16>
    tpu.vector_store %arg10[%c0_61, %c3_62, %c0_63, %c0_64], %85 {strides = array<i32>} : memref<1x4x8x8xbf16, #tpu.memory_space<vmem>>, vector<1x1x8x8xbf16>,
    return
  }
  func.func @transform_0(%arg0: i32, %arg1: i32) -> (i32, i32, i32) {
    %c0_i32 = arith.constant 0 : i32
    %c0_i32_0 = arith.constant 0 : i32
    return %arg0, %arg1, %c0_i32 : i32, i32, i32
  }
  func.func @transform_1(%arg0: i32, %arg1: i32) -> (i32, i32) {
    %c0_i32 = arith.constant 0 : i32
    %c0_i32_0 = arith.constant 0 : i32
    %c0_i32_1 = arith.constant 0 : i32
    return %c0_i32, %c0_i32_0 : i32, i32
  }
  func.func @transform_2(%arg0: i32, %arg1: i32) -> (i32, i32) {
    %c0_i32 = arith.constant 0 : i32
    %c0_i32_0 = arith.constant 0 : i32
    %c0_i32_1 = arith.constant 0 : i32
    return %c0_i32, %c0_i32_0 : i32, i32
  }
  func.func @transform_3(%arg0: i32, %arg1: i32) -> (i32, i32) {
    %c0_i32 = arith.constant 0 : i32
    %c0_i32_0 = arith.constant 0 : i32
    %c0_i32_1 = arith.constant 0 : i32
    return %c0_i32, %c0_i32_0 : i32, i32
  }
  func.func @transform_4(%arg0: i32, %arg1: i32) -> (i32, i32) {
    %c0_i32 = arith.constant 0 : i32
    %c0_i32_0 = arith.constant 0 : i32
    %c0_i32_1 = arith.constant 0 : i32
    return %c0_i32, %c0_i32_0 : i32, i32
  }
  func.func @transform_5(%arg0: i32, %arg1: i32) -> (i32, i32) {
    %c0_i32 = arith.constant 0 : i32
    %c0_i32_0 = arith.constant 0 : i32
    %c0_i32_1 = arith.constant 0 : i32
    return %c0_i32, %c0_i32_0 : i32, i32
  }
  func.func @transform_6(%arg0: i32, %arg1: i32) -> (i32, i32, i32, i32) {
    %c0_i32 = arith.constant 0 : i32
    %c0_i32_0 = arith.constant 0 : i32
    %c0_i32_1 = arith.constant 0 : i32
    return %arg0, %c0_i32, %arg1, %c0_i32_0 : i32, i32, i32, i32
  }
  func.func @transform_7(%arg0: i32, %arg1: i32) -> (i32, i32, i32, i32) {
    %c0_i32 = arith.constant 0 : i32
    %c0_i32_0 = arith.constant 0 : i32
    %c0_i32_1 = arith.constant 0 : i32
    return %arg0, %c0_i32, %arg1, %c0_i32_0 : i32, i32, i32, i32
  }
  func.func @transform_8(%arg0: i32, %arg1: i32) -> (i32, i32, i32, i32) {
    %c0_i32 = arith.constant 0 : i32
    %c0_i32_0 = arith.constant 0 : i32
    %c0_i32_1 = arith.constant 0 : i32
    return %arg0, %c0_i32, %arg1, %c0_i32_0 : i32, i32, i32, i32
  }
}

</mosaic_0001>

<llo_original>
// kernel: tpu_custom_call.1
$region0: #{tpu_custom_call.1}
  #allocation0 [shape = 'u32[]', space=smem, size = 0x4, offset = 0x4, fixed_abs, tag = 'smem constant byte address 0x4 - core index']
  #allocation1 [shape = 'u32[144,128]{1,0:T(1,128)}', space=vmem, size = 0x12000, scoped, tag = 'internal scratch']
  %s0 = inlined_call_operand.hbm [shape: f32[2,8,32], index: 0, kind: input, shape index: {}]
  %s1 = inlined_call_operand.vmem [shape: f32[1,32], index: 1, kind: input, shape index: {}]
  %s2 = inlined_call_operand.vmem [shape: f32[1,32], index: 2, kind: input, shape index: {}]
  %s3 = inlined_call_operand.hbm [shape: bf16[32,32], index: 3, kind: input, shape index: {}]
  %s4 = inlined_call_operand.hbm [shape: bf16[32,32], index: 4, kind: input, shape index: {}]
  %s5 = inlined_call_operand.vmem [shape: bf16[32,32], index: 5, kind: input, shape index: {}]
  %s6 = inlined_call_operand.hbm [shape: bf16[2,4,8,8], index: 6, kind: output, shape index: {0}]
  %s7 = inlined_call_operand.hbm [shape: bf16[2,4,8,8], index: 7, kind: output, shape index: {1}]
  %s8 = inlined_call_operand.hbm [shape: bf16[2,4,8,8], index: 8, kind: output, shape index: {2}]
  %9 = xla_tuple %s6, %s7, %s8
  %s10 = sld [smem:[#allocation0]]
  $region85: #{tpu_custom_call.1} parent=0
    _
  %s12 = ssub.s32 1, %s10
  %s13 = scalar_select 0, %s12, %s10
  $region1: #{tpu_custom_call.1} parent=0
    #allocation2 [shape = 'u8[8192]{0}', space=vmem, size = 0x2000, scoped, tag = 'input window, operand 0']
    #allocation3 [shape = 's32[2]{0}', space=sflag, size = 0x8, scoped, tag = 'scoped memory for tpu_custom_call.1']
    #allocation4 [shape = 's32[2]{0}', space=sflag, size = 0x8, scoped, tag = 'scoped memory for tpu_custom_call.1']
    #allocation5 [shape = 'u8[8192]{0}', space=vmem, size = 0x2000, scoped, tag = 'input window, operand 3, single buffered']
    #allocation6 [shape = 's32[1]{0}', space=sflag, size = 0x4, scoped, tag = 'scoped memory for tpu_custom_call.1']
    #allocation7 [shape = 'u8[8192]{0}', space=vmem, size = 0x2000, scoped, tag = 'input window, operand 4, single buffered']
    #allocation8 [shape = 'u8[16384]{0}', space=vmem, size = 0x4000, scoped, tag = 'output window, operand 0']
    #allocation9 [shape = 'u8[16384]{0}', space=vmem, size = 0x4000, scoped, tag = 'output window, operand 1']
    #allocation10 [shape = 's32[2]{0}', space=sflag, size = 0x8, scoped, tag = 'scoped memory for tpu_custom_call.1']
    #allocation11 [shape = 'u8[16384]{0}', space=vmem, size = 0x4000, scoped, tag = 'output window, operand 2']
    %14 = vsyncpa [#allocation3], 0
    %s15 = scalar_lea.sflag [#allocation3], 1
    %16 = vsyncpa %s15, 0
    %17 = vsyncpa [#allocation6], 0
    %18 = vsyncpa [#allocation4], 0
    %s19 = scalar_lea.sflag [#allocation4], 1
    %20 = vsyncpa %s19, 0
    %21 = vsyncpa [#allocation10], 0
    %s22 = scalar_lea.sflag [#allocation10], 1
    %23 = vsyncpa %s22, 0
    loop: start=0, step=1, limit=4
    $region2: #{tpu_custom_call.1} parent=1 // loop_pre_header
      _
    $region3: #{tpu_custom_call.1} parent=1 // loop_header
      %s25 = sphi 0, %s29
      %p26 = scmp.ge.s32.totalorder %s25, 4
      %s32 = sphi 0, %s44
      %s33 = sphi 0, %s40
      %s34 = sphi 0, %s32
      %s35 = sphi 0, %s33
      %s36 = sphi 0, %s34
      %s37 = sphi 0, %s35
      %s49 = sphi 0, %s51
      %s52 = sphi 0, %s49
      %s53 = sphi 0, %s52
      %s69 = sphi 0, %s53
      %s73 = sphi 0, %s73
      %s75 = sphi 0, %s73
      %s76 = sphi 0, %s75
      %s90 = sphi 0, %s76
      %s94 = sphi 0, %s94
      %s96 = sphi 0, %s94
      %s97 = sphi 0, %s96
      %s111 = sphi 0, %s97
      %s115 = sphi 0, %s115
      %s117 = sphi 0, %s115
      %s118 = sphi 0, %s117
      %s132 = sphi 0, %s118
      %s136 = sphi 0, %s136
      %s138 = sphi 0, %s136
      %s139 = sphi 0, %s138
      %s153 = sphi 0, %s139
      %s157 = sphi 0, %s157
      %s159 = sphi 0, %s157
      %s160 = sphi 0, %s159
      %s174 = sphi 0, %s160
      %s182 = sphi 0, %s184
      %s185 = sphi 0, %s182
      %s186 = sphi 0, %s185
      %s202 = sphi 0, %s186
      %s210 = sphi 0, %s212
      %s213 = sphi 0, %s210
      %s214 = sphi 0, %s213
      %s230 = sphi 0, %s214
      %s238 = sphi 0, %s240
      %s241 = sphi 0, %s238
      %s242 = sphi 0, %s241
      %s258 = sphi 0, %s242
    $region4: #{tpu_custom_call.1} parent=1 // loop_header_branch
      %28 = sbr.rel (%p26) target = $region8
    $region5: #{tpu_custom_call.1} parent=1 // loop_body
      %s30 = ssub.s32 %s25, 1
      %s31 = ssub.s32 %s25, 2
      %s38 = sadd.s32 1, %s33
      %p39 = scmp.ge.s32.totalorder %s38, 1
      %s40 = scalar_select %p39, 0, %s38
      %s41 = sadd.s32 1, %s32
      %s42 = scalar_select %p39, %s41, %s32
      %p43 = scmp.ge.s32.totalorder %s42, 2
      %s44 = scalar_select %p43, 0, %s42
      %s45 = ssub.s32 %s32, %s44
      %s46 = ssub.s32 %s33, %s40
      %s47 = sor.u32 %s45, %s46
      %p48 = scmp.eq.s32.totalorder %s47, 0
      %s50 = sadd.s32 %s49, 1
      %s51 = scalar_select %p48, %s49, %s50
      %p54 = pneg %p48
      %p55 = scmp.eq.s32.totalorder %s25, 1
      %p56 = por %p54, %p55
      %p57 = scmp.ne.s32.totalorder %s49, %s52
      %p58 = scmp.eq.s32.totalorder %s25, 0
      %p59 = por %p57, %p58
      %p60 = scmp.ne.s32.totalorder %s49, %s52
      %p61 = scmp.eq.s32.totalorder %s30, 1
      %p62 = por %p60, %p61
      %p63 = scmp.ne.s32.totalorder %s52, %s53
      %p64 = scmp.eq.s32.totalorder %s30, 0
      %p65 = por %p63, %p64
      %p66 = scmp.ne.s32.totalorder %s52, %s53
      %p67 = scmp.eq.s32.totalorder %s31, 1
      %p68 = por %p66, %p67
      %p70 = scmp.ne.s32.totalorder %s53, %s69
      %p71 = scmp.eq.s32.totalorder %s31, 0
      %p72 = por %p70, %p71
      %s74 = sadd.s32 %s73, 1
      %p77 = scmp.eq.s32.totalorder %s25, 1
      %p78 = scmp.ne.s32.totalorder %s73, %s75
      %p79 = scmp.eq.s32.totalorder %s25, 0
      %p80 = por %p78, %p79
      %p81 = scmp.ne.s32.totalorder %s73, %s75
      %p82 = scmp.eq.s32.totalorder %s30, 1
      %p83 = por %p81, %p82
      %p84 = scmp.ne.s32.totalorder %s75, %s76
      %p85 = scmp.eq.s32.totalorder %s30, 0
      %p86 = por %p84, %p85
      %p87 = scmp.ne.s32.totalorder %s75, %s76
      %p88 = scmp.eq.s32.totalorder %s31, 1
      %p89 = por %p87, %p88
      %p91 = scmp.ne.s32.totalorder %s76, %s90
      %p92 = scmp.eq.s32.totalorder %s31, 0
      %p93 = por %p91, %p92
      %s95 = sadd.s32 %s94, 1
      %p98 = scmp.eq.s32.totalorder %s25, 1
      %p99 = scmp.ne.s32.totalorder %s94, %s96
      %p100 = scmp.eq.s32.totalorder %s25, 0
      %p101 = por %p99, %p100
      %p102 = scmp.ne.s32.totalorder %s94, %s96
      %p103 = scmp.eq.s32.totalorder %s30, 1
      %p104 = por %p102, %p103
      %p105 = scmp.ne.s32.totalorder %s96, %s97
      %p106 = scmp.eq.s32.totalorder %s30, 0
      %p107 = por %p105, %p106
      %p108 = scmp.ne.s32.totalorder %s96, %s97
      %p109 = scmp.eq.s32.totalorder %s31, 1
      %p110 = por %p108, %p109
      %p112 = scmp.ne.s32.totalorder %s97, %s111
      %p113 = scmp.eq.s32.totalorder %s31, 0
      %p114 = por %p112, %p113
      %s116 = sadd.s32 %s115, 1
      %p119 = scmp.eq.s32.totalorder %s25, 1
      %p120 = scmp.ne.s32.totalorder %s115, %s117
      %p121 = scmp.eq.s32.totalorder %s25, 0
      %p122 = por %p120, %p121
      %p123 = scmp.ne.s32.totalorder %s115, %s117
      %p124 = scmp.eq.s32.totalorder %s30, 1
      %p125 = por %p123, %p124
      %p126 = scmp.ne.s32.totalorder %s117, %s118
      %p127 = scmp.eq.s32.totalorder %s30, 0
      %p128 = por %p126, %p127
      %p129 = scmp.ne.s32.totalorder %s117, %s118
      %p130 = scmp.eq.s32.totalorder %s31, 1
      %p131 = por %p129, %p130
      %p133 = scmp.ne.s32.totalorder %s118, %s132
      %p134 = scmp.eq.s32.totalorder %s31, 0
      %p135 = por %p133, %p134
      %s137 = sadd.s32 %s136, 1
      %p140 = scmp.eq.s32.totalorder %s25, 1
      %p141 = scmp.ne.s32.totalorder %s136, %s138
      %p142 = scmp.eq.s32.totalorder %s25, 0
      %p143 = por %p141, %p142
      %p144 = scmp.ne.s32.totalorder %s136, %s138
      %p145 = scmp.eq.s32.totalorder %s30, 1
      %p146 = por %p144, %p145
      %p147 = scmp.ne.s32.totalorder %s138, %s139
      %p148 = scmp.eq.s32.totalorder %s30, 0
      %p149 = por %p147, %p148
      %p150 = scmp.ne.s32.totalorder %s138, %s139
      %p151 = scmp.eq.s32.totalorder %s31, 1
      %p152 = por %p150, %p151
      %p154 = scmp.ne.s32.totalorder %s139, %s153
      %p155 = scmp.eq.s32.totalorder %s31, 0
      %p156 = por %p154, %p155
      %s158 = sadd.s32 %s157, 1
      %p161 = scmp.eq.s32.totalorder %s25, 1
      %p162 = scmp.ne.s32.totalorder %s157, %s159
      %p163 = scmp.eq.s32.totalorder %s25, 0
      %p164 = por %p162, %p163
      %p165 = scmp.ne.s32.totalorder %s157, %s159
      %p166 = scmp.eq.s32.totalorder %s30, 1
      %p167 = por %p165, %p166
      %p168 = scmp.ne.s32.totalorder %s159, %s160
      %p169 = scmp.eq.s32.totalorder %s30, 0
      %p170 = por %p168, %p169
      %p171 = scmp.ne.s32.totalorder %s159, %s160
      %p172 = scmp.eq.s32.totalorder %s31, 1
      %p173 = por %p171, %p172
      %p175 = scmp.ne.s32.totalorder %s160, %s174
      %p176 = scmp.eq.s32.totalorder %s31, 0
      %p177 = por %p175, %p176
      %s178 = ssub.s32 %s32, %s44
      %s179 = ssub.s32 %s33, %s40
      %s180 = sor.u32 %s178, %s179
      %p181 = scmp.eq.s32.totalorder %s180, 0
      %s183 = sadd.s32 %s182, 1
      %s184 = scalar_select %p181, %s182, %s183
      %p187 = pneg %p181
      %p188 = scmp.eq.s32.totalorder %s25, 1
      %p189 = por %p187, %p188
      %p190 = scmp.ne.s32.totalorder %s182, %s185
      %p191 = scmp.eq.s32.totalorder %s25, 0
      %p192 = por %p190, %p191
      %p193 = scmp.ne.s32.totalorder %s182, %s185
      %p194 = scmp.eq.s32.totalorder %s30, 1
      %p195 = por %p193, %p194
      %p196 = scmp.ne.s32.totalorder %s185, %s186
      %p197 = scmp.eq.s32.totalorder %s30, 0
      %p198 = por %p196, %p197
      %p199 = scmp.ne.s32.totalorder %s185, %s186
      %p200 = scmp.eq.s32.totalorder %s31, 1
      %p201 = por %p199, %p200
      %p203 = scmp.ne.s32.totalorder %s186, %s202
      %p204 = scmp.eq.s32.totalorder %s31, 0
      %p205 = por %p203, %p204
      %s206 = ssub.s32 %s32, %s44
      %s207 = ssub.s32 %s33, %s40
      %s208 = sor.u32 %s206, %s207
      %p209 = scmp.eq.s32.totalorder %s208, 0
      %s211 = sadd.s32 %s210, 1
      %s212 = scalar_select %p209, %s210, %s211
      %p215 = pneg %p209
      %p216 = scmp.eq.s32.totalorder %s25, 1
      %p217 = por %p215, %p216
      %p218 = scmp.ne.s32.totalorder %s210, %s213
      %p219 = scmp.eq.s32.totalorder %s25, 0
      %p220 = por %p218, %p219
      %p221 = scmp.ne.s32.totalorder %s210, %s213
      %p222 = scmp.eq.s32.totalorder %s30, 1
      %p223 = por %p221, %p222
      %p224 = scmp.ne.s32.totalorder %s213, %s214
      %p225 = scmp.eq.s32.totalorder %s30, 0
      %p226 = por %p224, %p225
      %p227 = scmp.ne.s32.totalorder %s213, %s214
      %p228 = scmp.eq.s32.totalorder %s31, 1
      %p229 = por %p227, %p228
      %p231 = scmp.ne.s32.totalorder %s214, %s230
      %p232 = scmp.eq.s32.totalorder %s31, 0
      %p233 = por %p231, %p232
      %s234 = ssub.s32 %s32, %s44
      %s235 = ssub.s32 %s33, %s40
      %s236 = sor.u32 %s234, %s235
      %p237 = scmp.eq.s32.totalorder %s236, 0
      %s239 = sadd.s32 %s238, 1
      %s240 = scalar_select %p237, %s238, %s239
      %p243 = pneg %p237
      %p244 = scmp.eq.s32.totalorder %s25, 1
      %p245 = por %p243, %p244
      %p246 = scmp.ne.s32.totalorder %s238, %s241
      %p247 = scmp.eq.s32.totalorder %s25, 0
      %p248 = por %p246, %p247
      %p249 = scmp.ne.s32.totalorder %s238, %s241
      %p250 = scmp.eq.s32.totalorder %s30, 1
      %p251 = por %p249, %p250
      %p252 = scmp.ne.s32.totalorder %s241, %s242
      %p253 = scmp.eq.s32.totalorder %s30, 0
      %p254 = por %p252, %p253
      %p255 = scmp.ne.s32.totalorder %s241, %s242
      %p256 = scmp.eq.s32.totalorder %s31, 1
      %p257 = por %p255, %p256
      %p259 = scmp.ne.s32.totalorder %s242, %s258
      %p260 = scmp.eq.s32.totalorder %s31, 0
      %p261 = por %p259, %p260
      %p262 = scmp.le.s32.totalorder 1, %s25
      %p263 = scmp.lt.s32.totalorder %s25, 3
      %p264 = pnand %p262, %p263
      %p265 = pneg %p264
      // Predicated region
      $region9: #{tpu_custom_call.1} parent=5 // pred_check
        _
      $region10: #{tpu_custom_call.1} parent=5 // pred_check_branch
        %267 = sbr.rel (%p264) target = $region12
      $region11: #{tpu_custom_call.1} parent=5 // pred_region
        %s268 = ssub.s32 %s25, 1
        // Predicated region
        $region13: #{tpu_custom_call.1} parent=11 // pred_check
          %p269 = pneg %p86
        $region14: #{tpu_custom_call.1} parent=11 // pred_check_branch
          %271 = sbr.rel (%p269) target = $region16
        $region15: #{tpu_custom_call.1} parent=11 // pred_region
          _
        $region16: #{tpu_custom_call.1} parent=11 // pred_fallthru
          _
        // Predicated region
        $region17: #{tpu_custom_call.1} parent=11 // pred_check
          %p272 = pneg %p107
        $region18: #{tpu_custom_call.1} parent=11 // pred_check_branch
          %274 = sbr.rel (%p272) target = $region20
        $region19: #{tpu_custom_call.1} parent=11 // pred_region
          _
        $region20: #{tpu_custom_call.1} parent=11 // pred_fallthru
          _
        // Predicated region
        $region21: #{tpu_custom_call.1} parent=11 // pred_check
          %p275 = pneg %p128
        $region22: #{tpu_custom_call.1} parent=11 // pred_check_branch
          %277 = sbr.rel (%p275) target = $region24
        $region23: #{tpu_custom_call.1} parent=11 // pred_region
          %s279 = ssub.s32 256, 256
          %280 = vsyncadd [#allocation6], %s279
          %s281 = sshll.u32 [#allocation5], 4
          %s282 = int_to_ptr.vmem [resolvable:$true] %s281
          %287 = dma.hbm_to_vmem [thread:$0]  %s3, 256, %s282, [#allocation6], 64, 64, 4
        $region24: #{tpu_custom_call.1} parent=11 // pred_fallthru
          _
        // Predicated region
        $region25: #{tpu_custom_call.1} parent=11 // pred_check
          %p288 = pneg %p149
        $region26: #{tpu_custom_call.1} parent=11 // pred_check_branch
          %290 = sbr.rel (%p288) target = $region28
        $region27: #{tpu_custom_call.1} parent=11 // pred_region
          %s292 = ssub.s32 256, 256
          %293 = vsyncadd [#allocation6], %s292
          %s294 = sshll.u32 [#allocation7], 4
          %s295 = int_to_ptr.vmem [resolvable:$true] %s294
          %300 = dma.hbm_to_vmem [thread:$0]  %s4, 256, %s295, [#allocation6], 64, 64, 4
        $region28: #{tpu_custom_call.1} parent=11 // pred_fallthru
          _
        // Predicated region
        $region29: #{tpu_custom_call.1} parent=11 // pred_check
          %p301 = pneg %p170
        $region30: #{tpu_custom_call.1} parent=11 // pred_check_branch
          %303 = sbr.rel (%p301) target = $region32
        $region31: #{tpu_custom_call.1} parent=11 // pred_region
          _
        $region32: #{tpu_custom_call.1} parent=11 // pred_fallthru
          _
      $region12: #{tpu_custom_call.1} parent=5 // pred_fallthru
        _
      %p304 = scmp.lt.s32.totalorder %s25, 2
      // Predicated region
      $region33: #{tpu_custom_call.1} parent=5 // pred_check
        %p305 = pneg %p304
      $region34: #{tpu_custom_call.1} parent=5 // pred_check_branch
        %307 = sbr.rel (%p305) target = $region36
      $region35: #{tpu_custom_call.1} parent=5 // pred_region
        // Predicated region
        $region37: #{tpu_custom_call.1} parent=35 // pred_check
          %p308 = pneg %p59
        $region38: #{tpu_custom_call.1} parent=35 // pred_check_branch
          %310 = sbr.rel (%p308) target = $region40
        $region39: #{tpu_custom_call.1} parent=35 // pred_region
          %s311 = sand.u32 %s49, 1
          %s312 = scalar_lea.sflag [#allocation3], %s311
          %s313 = sand.u32 %s49, 1
          %s314 = smul.addr %s313, 8
          %s315 = scalar_lea.vmem [#allocation2], %s314
          %s317 = ssub.s32 128, 128
          %318 = vsyncadd %s312, %s317
          %s319 = sadd.s32 %s33, %s32
          %s320 = smul.addr %s319, 128
          %s321 = scalar_lea.hbm %s0, %s320
          %s323 = sshll.u32 %s315, 4
          %s324 = int_to_ptr.vmem [resolvable:$true] %s323
          %326 = dma.hbm_to_vmem [thread:$0]  %s321, 128, %s324, %s312
        $region40: #{tpu_custom_call.1} parent=35 // pred_fallthru
          _
      $region36: #{tpu_custom_call.1} parent=5 // pred_fallthru
        _
      %p327 = scmp.le.s32.totalorder 1, %s25
      %p328 = scmp.lt.s32.totalorder %s25, 3
      %p329 = pnand %p327, %p328
      %p330 = pneg %p329
      // Predicated region
      $region41: #{tpu_custom_call.1} parent=5 // pred_check
        _
      $region42: #{tpu_custom_call.1} parent=5 // pred_check_branch
        %332 = sbr.rel (%p329) target = $region44
      $region43: #{tpu_custom_call.1} parent=5 // pred_region
        %s333 = ssub.s32 %s25, 1
        %s334 = sand.u32 %s52, 1
        %s335 = scalar_lea.sflag [#allocation3], %s334
        %s336 = sand.u32 %s52, 1
        %s337 = smul.addr %s336, 8
        %s338 = scalar_lea.vmem [#allocation2], %s337
        // Predicated region
        $region45: #{tpu_custom_call.1} parent=43 // pred_check
          %p339 = pneg %p65
        $region46: #{tpu_custom_call.1} parent=43 // pred_check_branch
          %341 = sbr.rel (%p339) target = $region48
        $region47: #{tpu_custom_call.1} parent=43 // pred_region
          %342 = dma.done %s335, 128
        $region48: #{tpu_custom_call.1} parent=43 // pred_fallthru
          _
        // Predicated region
        $region49: #{tpu_custom_call.1} parent=43 // pred_check
          %p343 = pneg %p128
        $region50: #{tpu_custom_call.1} parent=43 // pred_check_branch
          %345 = sbr.rel (%p343) target = $region52
        $region51: #{tpu_custom_call.1} parent=43 // pred_region
          %346 = dma.done [#allocation6], 256
        $region52: #{tpu_custom_call.1} parent=43 // pred_fallthru
          _
        // Predicated region
        $region53: #{tpu_custom_call.1} parent=43 // pred_check
          %p347 = pneg %p149
        $region54: #{tpu_custom_call.1} parent=43 // pred_check_branch
          %349 = sbr.rel (%p347) target = $region56
        $region55: #{tpu_custom_call.1} parent=43 // pred_region
          %350 = dma.done [#allocation6], 256
        $region56: #{tpu_custom_call.1} parent=43 // pred_fallthru
          _
        %s351 = sand.u32 %s52, 1
        %s352 = scalar_lea.sflag [#allocation3], %s351
        %s353 = sand.u32 %s52, 1
        %s354 = smul.addr %s353, 8
        %s355 = scalar_lea.vmem [#allocation2], %s354
        %p356 = pneg %p65
        %p357 = pneg %p62
        %p358 = pneg %p86
        %p359 = pneg %p83
        %p360 = pneg %p107
        %p361 = pneg %p104
        %p362 = pneg %p128
        %p363 = pneg %p125
        %p364 = pneg %p149
        %p365 = pneg %p146
        %p366 = pneg %p170
        %p367 = pneg %p167
        %p368 = pneg %p198
        %p369 = pneg %p195
        %s370 = sand.u32 %s185, 1
        %s371 = scalar_lea.sflag [#allocation4], %s370
        %s372 = sand.u32 %s185, 1
        %s373 = smul.addr %s372, 16
        %s374 = scalar_lea.vmem [#allocation8], %s373
        %p375 = pneg %p226
        %p376 = pneg %p223
        %s377 = sand.u32 %s30, 1
        %s378 = scalar_lea.sflag [#allocation10], %s377
        %s379 = sand.u32 %s213, 1
        %s380 = smul.addr %s379, 16
        %s381 = scalar_lea.vmem [#allocation9], %s380
        %p382 = pneg %p254
        %p383 = pneg %p251
        %s384 = sand.u32 %s30, 1
        %s385 = scalar_lea.sflag [#allocation10], %s384
        %s386 = sand.u32 %s241, 1
        %s387 = smul.addr %s386, 16
        %s388 = scalar_lea.vmem [#allocation11], %s387
        %v390 = vld [vmem:[%s338] sm:$0xff]
        %v391 = vld [vmem:[%s1] sm:$0x1]
        %v392 = vld [vmem:[%s2] sm:$0x1]
        %vm393 = vcmask 261120
        %v394 = vsel %vm393, %v390, 0.0
        %395 = vadd.xlane.f32.xlu0 %v394
        %v396 = vpop.xlane.xlu0 %395
        %v397 = vrcp.pop 32.0
        %v398 = vmul.f32 %v396, %v397
        %v399 = vsub.f32 %v390, %v398
        %v400 = vmul.f32 %v399, %v399
        %v401 = vsel %vm393, %v400, 0.0
        %402 = vadd.xlane.f32.xlu0 %v401
        %v403 = vpop.xlane.xlu0 %402
        %v404 = vmul.f32 %v403, %v397
        %v405 = vadd.f32 %v404, 1e-05
        %v406 = vrsqrt.pop %v405
        %v407 = vmul.f32 %v399, %v406
        %v409 = vlaneseq
        %v410 = vshrl.u32 %v409, 7
        %v411 = vsub.s32 0, %v410
        %v412 = vrot.slane %v391, %v411
        %v414 = vmul.f32 %v407, %v412
        %v416 = vlaneseq
        %v417 = vshrl.u32 %v416, 7
        %v418 = vsub.s32 0, %v417
        %v419 = vrot.slane %v392, %v418
        %v421 = vadd.f32 %v414, %v419
        %v422 = vpack.c.bf16 %v421, %v421
        %v423 = vld [vmem:[#allocation5] sm:$0xf]
        %v424 = vld [vmem:[#allocation5 + $0x4] sm:$0xf]
        %v425 = vld [vmem:[#allocation5 + $0x8] sm:$0xf]
        %v426 = vld [vmem:[#allocation5 + $0xc] sm:$0xf]
        %v431 = vunpack.c.l.b16 %v423
        %v432 = vunpack.c.l.b16 %v424
        %v433 = vunpack.c.l.b16 %v425
        %v434 = vunpack.c.l.b16 %v426
        %v435 = vpack.c.b16 %v432, %v431
        %v436 = vpack.c.b16 %v434, %v433
        %v440 = vsel %vm393, %v422, 0
        %442 = vmatprep.subr.bf16.mxu0 0
        %443 = vmatpush1.bf16.msra.mxu0 %v435
        %444 = vmatprep.subr.bf16.mxu0 0
        %445 = vmatpush1.bf16.msra.mxu0 %v436
        %446 = vmatprep.subr.bf16.mxu0 0
        %447 = vmatpush1.bf16.msra.mxu0 0
        %448 = vmatprep.subr.bf16.mxu0 0
        %449 = vmatpush1.bf16.msra.mxu0 0
        %450 = vmatprep.subr.bf16.mxu0 0
        %451 = vmatpush1.bf16.msra.mxu0 0
        %452 = vmatprep.subr.bf16.mxu0 0
        %453 = vmatpush1.bf16.msra.mxu0 0
        %454 = vmatprep.subr.bf16.mxu0 0
        %455 = vmatpush1.bf16.msra.mxu0 0
        %456 = vmatprep.subr.bf16.mxu0 0
        %457 = vmatpush1.bf16.msra.mxu0 0
        %458 = vmatprep.subr.bf16.mxu0 0
        %459 = vmatpush1.bf16.msra.mxu0 0
        %460 = vmatprep.subr.bf16.mxu0 0
        %461 = vmatpush1.bf16.msra.mxu0 0
        %462 = vmatprep.subr.bf16.mxu0 0
        %463 = vmatpush1.bf16.msra.mxu0 0
        %464 = vmatprep.subr.bf16.mxu0 0
        %465 = vmatpush1.bf16.msra.mxu0 0
        %466 = vmatprep.subr.bf16.mxu0 0
        %467 = vmatpush1.bf16.msra.mxu0 0
        %468 = vmatprep.subr.bf16.mxu0 0
        %469 = vmatpush1.bf16.msra.mxu0 0
        %470 = vmatprep.subr.bf16.mxu0 0
        %471 = vmatpush1.bf16.msra.mxu0 0
        %472 = vmatprep.subr.bf16.mxu0 0
        %473 = vmatpush1.bf16.msra.mxu0 0
        %474 = vmatprep.mubr.bf16.mxu0 0
        %475 = vmatmul.mubr.bf16.gmra.mrb[0].mxu0 %v440
        %v476 = vpop.f32.mrb[0].mxu0
        %v477 = vadd.f32 0.0, %v476
        %v478 = vpop.f32.mrb[0].mxu0
        %v479 = vpop.f32.mrb[0].mxu0
        %v480 = vpop.f32.mrb[0].mxu0
        %481 = vdwg.mxu0
        %v482 = vmul.f32 %v477, 0.35355338
        %v483 = vpack.c.bf16 %v482, %v482
        %vm484 = vcmask 60416
        %485 = vst.msk [vmem:[%s374] sm:$0xf] %vm484, %v483
        %v487 = vunpack.c.l.b16 %v483
        %v488 = vpack.c.b16 %v487, %v487
        %489 = vrot.lane.b32.xlu0 %v488, 120
        %v490 = vpop.permute.xlu0 %489
        %s492 = scalar_lea.vmem %s374, 4 [#allocation8]
        %493 = vst.msk [vmem:[%s492] sm:$0xf] %vm484, %v490
        %494 = vrot.lane.b32.xlu0 %v488, 112
        %v495 = vpop.permute.xlu0 %494
        %s497 = scalar_lea.vmem %s374, 8 [#allocation8]
        %498 = vst.msk [vmem:[%s497] sm:$0xf] %vm484, %v495
        %499 = vrot.lane.b32.xlu0 %v488, 104
        %v500 = vpop.permute.xlu0 %499
        %s502 = scalar_lea.vmem %s374, 12 [#allocation8]
        %503 = vst.msk [vmem:[%s502] sm:$0xf] %vm484, %v500
        %v504 = vld [vmem:[#allocation7] sm:$0xf]
        %v505 = vld [vmem:[#allocation7 + $0x4] sm:$0xf]
        %v506 = vld [vmem:[#allocation7 + $0x8] sm:$0xf]
        %v507 = vld [vmem:[#allocation7 + $0xc] sm:$0xf]
        %v512 = vunpack.c.l.b16 %v504
        %v513 = vunpack.c.l.b16 %v505
        %v514 = vunpack.c.l.b16 %v506
        %v515 = vunpack.c.l.b16 %v507
        %v516 = vpack.c.b16 %v513, %v512
        %v517 = vpack.c.b16 %v515, %v514
        %520 = vmatprep.subr.bf16.mxu0 0
        %521 = vmatpush1.bf16.msra.mxu0 %v516
        %522 = vmatprep.subr.bf16.mxu0 0
        %523 = vmatpush1.bf16.msra.mxu0 %v517
        %524 = vmatprep.subr.bf16.mxu0 0
        %525 = vmatpush1.bf16.msra.mxu0 0
        %526 = vmatprep.subr.bf16.mxu0 0
        %527 = vmatpush1.bf16.msra.mxu0 0
        %528 = vmatprep.subr.bf16.mxu0 0
        %529 = vmatpush1.bf16.msra.mxu0 0
        %530 = vmatprep.subr.bf16.mxu0 0
        %531 = vmatpush1.bf16.msra.mxu0 0
        %532 = vmatprep.subr.bf16.mxu0 0
        %533 = vmatpush1.bf16.msra.mxu0 0
        %534 = vmatprep.subr.bf16.mxu0 0
        %535 = vmatpush1.bf16.msra.mxu0 0
        %536 = vmatprep.subr.bf16.mxu0 0
        %537 = vmatpush1.bf16.msra.mxu0 0
        %538 = vmatprep.subr.bf16.mxu0 0
        %539 = vmatpush1.bf16.msra.mxu0 0
        %540 = vmatprep.subr.bf16.mxu0 0
        %541 = vmatpush1.bf16.msra.mxu0 0
        %542 = vmatprep.subr.bf16.mxu0 0
        %543 = vmatpush1.bf16.msra.mxu0 0
        %544 = vmatprep.subr.bf16.mxu0 0
        %545 = vmatpush1.bf16.msra.mxu0 0
        %546 = vmatprep.subr.bf16.mxu0 0
        %547 = vmatpush1.bf16.msra.mxu0 0
        %548 = vmatprep.subr.bf16.mxu0 0
        %549 = vmatpush1.bf16.msra.mxu0 0
        %550 = vmatprep.subr.bf16.mxu0 0
        %551 = vmatpush1.bf16.msra.mxu0 0
        %552 = vmatprep.mubr.bf16.mxu0 0
        %553 = vmatmul.mubr.bf16.gmra.mrb[0].mxu0 %v440
        %v554 = vpop.f32.mrb[0].mxu0
        %v555 = vadd.f32 0.0, %v554
        %v556 = vpop.f32.mrb[0].mxu0
        %v557 = vpop.f32.mrb[0].mxu0
        %v558 = vpop.f32.mrb[0].mxu0
        %559 = vdwg.mxu0
        %v560 = vpack.c.bf16 %v555, %v555
        %561 = vst.msk [vmem:[%s381] sm:$0xf] %vm484, %v560
        %v563 = vunpack.c.l.b16 %v560
        %v564 = vpack.c.b16 %v563, %v563
        %565 = vrot.lane.b32.xlu0 %v564, 120
        %v566 = vpop.permute.xlu0 %565
        %s568 = scalar_lea.vmem %s381, 4 [#allocation9]
        %569 = vst.msk [vmem:[%s568] sm:$0xf] %vm484, %v566
        %570 = vrot.lane.b32.xlu0 %v564, 112
        %v571 = vpop.permute.xlu0 %570
        %s573 = scalar_lea.vmem %s381, 8 [#allocation9]
        %574 = vst.msk [vmem:[%s573] sm:$0xf] %vm484, %v571
        %575 = vrot.lane.b32.xlu0 %v564, 104
        %v576 = vpop.permute.xlu0 %575
        %s578 = scalar_lea.vmem %s381, 12 [#allocation9]
        %579 = vst.msk [vmem:[%s578] sm:$0xf] %vm484, %v576
        %v580 = vld [vmem:[%s5] sm:$0xf]
        %v581 = vld [vmem:[%s5 + $0x4] sm:$0xf]
        %v582 = vld [vmem:[%s5 + $0x8] sm:$0xf]
        %v583 = vld [vmem:[%s5 + $0xc] sm:$0xf]
        %v588 = vunpack.c.l.b16 %v580
        %v589 = vunpack.c.l.b16 %v581
        %v590 = vunpack.c.l.b16 %v582
        %v591 = vunpack.c.l.b16 %v583
        %v592 = vpack.c.b16 %v589, %v588
        %v593 = vpack.c.b16 %v591, %v590
        %596 = vmatprep.subr.bf16.mxu0 0
        %597 = vmatpush1.bf16.msra.mxu0 %v592
        %598 = vmatprep.subr.bf16.mxu0 0
        %599 = vmatpush1.bf16.msra.mxu0 %v593
        %600 = vmatprep.subr.bf16.mxu0 0
        %601 = vmatpush1.bf16.msra.mxu0 0
        %602 = vmatprep.subr.bf16.mxu0 0
        %603 = vmatpush1.bf16.msra.mxu0 0
        %604 = vmatprep.subr.bf16.mxu0 0
        %605 = vmatpush1.bf16.msra.mxu0 0
        %606 = vmatprep.subr.bf16.mxu0 0
        %607 = vmatpush1.bf16.msra.mxu0 0
        %608 = vmatprep.subr.bf16.mxu0 0
        %609 = vmatpush1.bf16.msra.mxu0 0
        %610 = vmatprep.subr.bf16.mxu0 0
        %611 = vmatpush1.bf16.msra.mxu0 0
        %612 = vmatprep.subr.bf16.mxu0 0
        %613 = vmatpush1.bf16.msra.mxu0 0
        %614 = vmatprep.subr.bf16.mxu0 0
        %615 = vmatpush1.bf16.msra.mxu0 0
        %616 = vmatprep.subr.bf16.mxu0 0
        %617 = vmatpush1.bf16.msra.mxu0 0
        %618 = vmatprep.subr.bf16.mxu0 0
        %619 = vmatpush1.bf16.msra.mxu0 0
        %620 = vmatprep.subr.bf16.mxu0 0
        %621 = vmatpush1.bf16.msra.mxu0 0
        %622 = vmatprep.subr.bf16.mxu0 0
        %623 = vmatpush1.bf16.msra.mxu0 0
        %624 = vmatprep.subr.bf16.mxu0 0
        %625 = vmatpush1.bf16.msra.mxu0 0
        %626 = vmatprep.subr.bf16.mxu0 0
        %627 = vmatpush1.bf16.msra.mxu0 0
        %628 = vmatprep.mubr.bf16.mxu0 0
        %629 = vmatmul.mubr.bf16.gmra.mrb[0].mxu0 %v440
        %v630 = vpop.f32.mrb[0].mxu0
        %v631 = vadd.f32 0.0, %v630
        %v632 = vpop.f32.mrb[0].mxu0
        %v633 = vpop.f32.mrb[0].mxu0
        %v634 = vpop.f32.mrb[0].mxu0
        %635 = vdwg.mxu0
        %v636 = vpack.c.bf16 %v631, %v631
        %637 = vst.msk [vmem:[%s388] sm:$0xf] %vm484, %v636
        %v639 = vunpack.c.l.b16 %v636
        %v640 = vpack.c.b16 %v639, %v639
        %641 = vrot.lane.b32.xlu0 %v640, 120
        %v642 = vpop.permute.xlu0 %641
        %s644 = scalar_lea.vmem %s388, 4 [#allocation11]
        %645 = vst.msk [vmem:[%s644] sm:$0xf] %vm484, %v642
        %646 = vrot.lane.b32.xlu0 %v640, 112
        %v647 = vpop.permute.xlu0 %646
        %s649 = scalar_lea.vmem %s388, 8 [#allocation11]
        %650 = vst.msk [vmem:[%s649] sm:$0xf] %vm484, %v647
        %651 = vrot.lane.b32.xlu0 %v640, 104
        %v652 = vpop.permute.xlu0 %651
        %s654 = scalar_lea.vmem %s388, 12 [#allocation11]
        %655 = vst.msk [vmem:[%s654] sm:$0xf] %vm484, %v652
        %s656 = sand.u32 %s185, 1
        %s657 = scalar_lea.sflag [#allocation4], %s656
        %s658 = sand.u32 %s185, 1
        %s659 = smul.addr %s658, 16
        %s660 = scalar_lea.vmem [#allocation8], %s659
        %s661 = sand.u32 %s30, 1
        %s662 = scalar_lea.sflag [#allocation10], %s661
        %s663 = sand.u32 %s213, 1
        %s664 = smul.addr %s663, 16
        %s665 = scalar_lea.vmem [#allocation9], %s664
        %s666 = sand.u32 %s30, 1
        %s667 = scalar_lea.sflag [#allocation10], %s666
        %s668 = sand.u32 %s241, 1
        %s669 = smul.addr %s668, 16
        %s670 = scalar_lea.vmem [#allocation11], %s669
        // Predicated region
        $region57: #{tpu_custom_call.1} parent=43 // pred_check
          %p671 = pneg %p195
        $region58: #{tpu_custom_call.1} parent=43 // pred_check_branch
          %673 = sbr.rel (%p671) target = $region60
        $region59: #{tpu_custom_call.1} parent=43 // pred_region
          %s675 = ssub.s32 256, 256
          %676 = vsyncadd %s657, %s675
          %s677 = smul.addr %s34, 4
          %s678 = sadd.s32 %s35, %s677
          %s679 = smul.addr %s678, 64
          %s680 = scalar_lea.hbm %s6, %s679
          %s681 = sshll.u32 %s660, 4
          %s682 = int_to_ptr.vmem [resolvable:$true] %s681
          %687 = dma.vmem_to_hbm [thread:$0]  %s682, 256, %s680, %s657, 64, 64, 4
        $region60: #{tpu_custom_call.1} parent=43 // pred_fallthru
          _
        // Predicated region
        $region61: #{tpu_custom_call.1} parent=43 // pred_check
          %p688 = pneg %p223
        $region62: #{tpu_custom_call.1} parent=43 // pred_check_branch
          %690 = sbr.rel (%p688) target = $region64
        $region63: #{tpu_custom_call.1} parent=43 // pred_region
          %s692 = ssub.s32 256, 256
          %693 = vsyncadd %s662, %s692
          %s694 = smul.addr %s34, 4
          %s695 = sadd.s32 %s35, %s694
          %s696 = smul.addr %s695, 64
          %s697 = scalar_lea.hbm %s7, %s696
          %s698 = sshll.u32 %s665, 4
          %s699 = int_to_ptr.vmem [resolvable:$true] %s698
          %704 = dma.vmem_to_hbm [thread:$0]  %s699, 256, %s697, %s662, 64, 64, 4
        $region64: #{tpu_custom_call.1} parent=43 // pred_fallthru
          _
        // Predicated region
        $region65: #{tpu_custom_call.1} parent=43 // pred_check
          %p705 = pneg %p251
        $region66: #{tpu_custom_call.1} parent=43 // pred_check_branch
          %707 = sbr.rel (%p705) target = $region68
        $region67: #{tpu_custom_call.1} parent=43 // pred_region
          %s709 = ssub.s32 256, 256
          %710 = vsyncadd %s667, %s709
          %s711 = smul.addr %s34, 4
          %s712 = sadd.s32 %s35, %s711
          %s713 = smul.addr %s712, 64
          %s714 = scalar_lea.hbm %s8, %s713
          %s715 = sshll.u32 %s670, 4
          %s716 = int_to_ptr.vmem [resolvable:$true] %s715
          %721 = dma.vmem_to_hbm [thread:$0]  %s716, 256, %s714, %s667, 64, 64, 4
        $region68: #{tpu_custom_call.1} parent=43 // pred_fallthru
          _
      $region44: #{tpu_custom_call.1} parent=5 // pred_fallthru
        _
      %p722 = scmp.le.s32.totalorder 2, %s25
      // Predicated region
      $region69: #{tpu_custom_call.1} parent=5 // pred_check
        %p723 = pneg %p722
      $region70: #{tpu_custom_call.1} parent=5 // pred_check_branch
        %725 = sbr.rel (%p723) target = $region72
      $region71: #{tpu_custom_call.1} parent=5 // pred_region
        %s726 = ssub.s32 %s25, 2
        // Predicated region
        $region73: #{tpu_custom_call.1} parent=71 // pred_check
          %p727 = pneg %p201
        $region74: #{tpu_custom_call.1} parent=71 // pred_check_branch
          %729 = sbr.rel (%p727) target = $region76
        $region75: #{tpu_custom_call.1} parent=71 // pred_region
          %s730 = sand.u32 %s186, 1
          %s731 = scalar_lea.sflag [#allocation4], %s730
          %s732 = sand.u32 %s186, 1
          %s733 = smul.addr %s732, 16
          %s734 = scalar_lea.vmem [#allocation8], %s733
          %735 = dma.done %s731, 256
        $region76: #{tpu_custom_call.1} parent=71 // pred_fallthru
          _
        // Predicated region
        $region77: #{tpu_custom_call.1} parent=71 // pred_check
          %p736 = pneg %p229
        $region78: #{tpu_custom_call.1} parent=71 // pred_check_branch
          %738 = sbr.rel (%p736) target = $region80
        $region79: #{tpu_custom_call.1} parent=71 // pred_region
          %s739 = sand.u32 %s31, 1
          %s740 = scalar_lea.sflag [#allocation10], %s739
          %s741 = sand.u32 %s214, 1
          %s742 = smul.addr %s741, 16
          %s743 = scalar_lea.vmem [#allocation9], %s742
          %744 = dma.done %s740, 256
        $region80: #{tpu_custom_call.1} parent=71 // pred_fallthru
          _
        // Predicated region
        $region81: #{tpu_custom_call.1} parent=71 // pred_check
          %p745 = pneg %p257
        $region82: #{tpu_custom_call.1} parent=71 // pred_check_branch
          %747 = sbr.rel (%p745) target = $region84
        $region83: #{tpu_custom_call.1} parent=71 // pred_region
          %s748 = sand.u32 %s31, 1
          %s749 = scalar_lea.sflag [#allocation10], %s748
          %s750 = sand.u32 %s242, 1
          %s751 = smul.addr %s750, 16
          %s752 = scalar_lea.vmem [#allocation11], %s751
          %753 = dma.done %s749, 256
        $region84: #{tpu_custom_call.1} parent=71 // pred_fallthru
          _
      $region72: #{tpu_custom_call.1} parent=5 // pred_fallthru
        _
    $region6: #{tpu_custom_call.1} parent=1 // loop_footer
      %s29 = sadd.s32 1, %s25
    $region7: #{tpu_custom_call.1} parent=1 // loop_footer_branch
      %24 = sbr.rel target = $region3
    $region8: #{tpu_custom_call.1} parent=1 // loop_exit
      _
    %754 = vsyncpa [#allocation3], 1
    %s755 = scalar_lea.sflag [#allocation3], 1
    %756 = vsyncpa %s755, 1
    %757 = vsyncpa [#allocation6], 1
    %758 = vsyncpa [#allocation4], 1
    %s759 = scalar_lea.sflag [#allocation4], 1
    %760 = vsyncpa %s759, 1
    %761 = vsyncpa [#allocation10], 1
    %s762 = scalar_lea.sflag [#allocation10], 1
    %763 = vsyncpa %s762, 1

</llo_original>
